<compile_context>
chip_gen: v6e
topology: v6e:2x2x1
jax: 0.10.0
libtpu: 0.0.40
codegen_flags: <defaults>
</compile_context>

<pallas_src>
import math

import jax
import jax.numpy as jnp
from jax import lax
from jax.experimental import pallas as pl
from jax.experimental.pallas import tpu as pltpu

H = 256  # hidden width of fc1/fc2


def _q_head(obs_b, act_b, w1o_ref, w1a_ref, b1_ref, w2_ref, b2_ref, w3_ref, b3_ref):
    """One critic head on bf16 activations; returns q transposed, shape (1, tb) f32."""
    # Layer 1 (fused torch.cat): obs @ W1[:obs_dim] + act @ W1[obs_dim:], bf16 -> f32 acc.
    h1 = (jnp.dot(obs_b, w1o_ref[...], preferred_element_type=jnp.float32)
          + jnp.dot(act_b, w1a_ref[...], preferred_element_type=jnp.float32)
          + b1_ref[...])
    h1 = jnp.maximum(h1, 0.0)
    # Layer 2: 256x256 matmul, bf16 operands (MXU-native), f32 accumulation; ReLU in f32.
    h2 = jnp.dot(h1.astype(jnp.bfloat16), w2_ref[...],
                 preferred_element_type=jnp.float32) + b2_ref[...]
    h2 = jnp.maximum(h2, 0.0)
    # Layer 3, transposed: contract w3 (1,H) with h2 (tb,H) on H -> (1, tb).
    # Result is lane-dense (batch along lanes) so the store is an unmasked full-lane write.
    qT = lax.dot_general(w3_ref[...], h2.astype(jnp.bfloat16),
                         dimension_numbers=(((1,), (1,)), ((), ())),
                         preferred_element_type=jnp.float32) + b3_ref[...]
    return qT


def _soft_q_kernel(obs_ref, act_ref, w1o_ref, w1a_ref, b1_ref,
                   w2_ref, b2_ref, w3_ref, b3_ref, o_ref):
    obs_b = obs_ref[...].astype(jnp.bfloat16)
    act_b = act_ref[...].astype(jnp.bfloat16)
    q = _q_head(obs_b, act_b, w1o_ref, w1a_ref, b1_ref, w2_ref, b2_ref, w3_ref, b3_ref)
    o_ref[...] = q.astype(o_ref.dtype)


def _soft_q_twin_kernel(obs_ref, act_ref,
                        w1o1, w1a1, b11, w21, b21, w31, b31,
                        w1o2, w1a2, b12, w22, b22, w32, b32,
                        o1_ref, o2_ref):
    obs_b = obs_ref[...].astype(jnp.bfloat16)
    act_b = act_ref[...].astype(jnp.bfloat16)
    o1_ref[...] = _q_head(obs_b, act_b, w1o1, w1a1, b11, w21, b21, w31, b31).astype(o1_ref.dtype)
    o2_ref[...] = _q_head(obs_b, act_b, w1o2, w1a2, b12, w22, b22, w32, b32).astype(o2_ref.dtype)


def _round_up(x, m):
    return ((x + m - 1) // m) * m


def _batch_tiling(B, batch_tile):
    """Pick a batch tile: single tile for small B, else >=2 tiles that are 128-multiples."""
    if B <= 256:
        return B, 1                               # all blocks equal full array dims -> always legal
    tb = max(128, min(batch_tile, _round_up(pl.cdiv(B, 2), 128)))
    return tb, pl.cdiv(B, tb)                     # ragged last tile handled by Pallas masking


def _param_specs(obs_dim, act_dim):
    """Weights/biases: same block every grid step -> DMA'd once, stay resident in VMEM."""
    return [
        pl.BlockSpec((obs_dim, H), lambda i: (0, 0)),   # w1 (obs rows), bf16
        pl.BlockSpec((act_dim, H), lambda i: (0, 0)),   # w1 (act rows), bf16
        pl.BlockSpec((1, H), lambda i: (0, 0)),         # b1, f32
        pl.BlockSpec((H, H), lambda i: (0, 0)),         # w2, bf16
        pl.BlockSpec((1, H), lambda i: (0, 0)),         # b2, f32
        pl.BlockSpec((1, H), lambda i: (0, 0)),         # w3 row vector, bf16
        pl.BlockSpec((1, 1), lambda i: (0, 0)),         # b3, f32
    ]


def _cost(B, obs_dim, act_dim, params, n_heads):
    d_in = obs_dim + act_dim
    w1o, w1a, b1, w2, b2, w3, b3 = params
    flops = 2 * B * (d_in * H + H * H + H) * n_heads
    param_bytes = ((w1o.size + w1a.size + w2.size + w3.size) * 2
                   + (b1.size + b2.size + b3.size) * 4) * n_heads
    bytes_accessed = B * d_in * 4 + B * 4 * n_heads + param_bytes
    return pl.CostEstimate(flops=flops, transcendentals=0, bytes_accessed=bytes_accessed)


def soft_q_forward(obs, act, params, *, batch_tile=1024):
    """obs: (B, obs_dim), act: (B, act_dim) -> q: (B, 1). Params from init_params."""
    w1o, w1a, b1, w2, b2, w3, b3 = params
    B, obs_dim = obs.shape
    act_dim = act.shape[1]
    tb, steps = _batch_tiling(B, batch_tile)

    out = pl.pallas_call(
        _soft_q_kernel,
        out_shape=jax.ShapeDtypeStruct((1, B), jnp.float32),
        grid=(steps,),
        in_specs=[pl.BlockSpec((tb, obs_dim), lambda i: (i, 0)),
                  pl.BlockSpec((tb, act_dim), lambda i: (i, 0)),
                  *_param_specs(obs_dim, act_dim)],
        out_specs=pl.BlockSpec((1, tb), lambda i: (0, i)),
        compiler_params=pltpu.CompilerParams(dimension_semantics=("parallel",)),
        cost_estimate=_cost(B, obs_dim, act_dim, params, n_heads=1),
    )(obs, act, w1o, w1a, b1, w2, b2, w3, b3)
    return out.reshape(B, 1)


def soft_q_forward_twin(obs, act, params1, params2, *, batch_tile=1024):
    """Fused SAC twin critics: one pallas_call, shared obs/act DMA -> (q1, q2), each (B, 1)."""
    B, obs_dim = obs.shape
    act_dim = act.shape[1]
    tb, steps = _batch_tiling(B, batch_tile)
    specs = _param_specs(obs_dim, act_dim)

    out1, out2 = pl.pallas_call(
        _soft_q_twin_kernel,
        out_shape=(jax.ShapeDtypeStruct((1, B), jnp.float32),
                   jax.ShapeDtypeStruct((1, B), jnp.float32)),
        grid=(steps,),
        in_specs=[pl.BlockSpec((tb, obs_dim), lambda i: (i, 0)),
                  pl.BlockSpec((tb, act_dim), lambda i: (i, 0)),
                  *specs, *specs],
        out_specs=(pl.BlockSpec((1, tb), lambda i: (0, i)),
                   pl.BlockSpec((1, tb), lambda i: (0, i))),
        compiler_params=pltpu.CompilerParams(dimension_semantics=("parallel",)),
        cost_estimate=_cost(B, obs_dim, act_dim, params1, n_heads=2),
    )(obs, act, *params1, *params2)
    return out1.reshape(B, 1), out2.reshape(B, 1)


def init_params(key, obs_dim, act_dim):
    """nn.Linear-style init U(-1/sqrt(fan_in), 1/sqrt(fan_in)); packed for the kernel ONCE."""
    d_in = obs_dim + act_dim

    def linear(k, fan_in, fan_out):
        kw, kb = jax.random.split(k)
        bound = 1.0 / math.sqrt(fan_in)
        w = jax.random.uniform(kw, (fan_in, fan_out), jnp.float32, -bound, bound)
        b = jax.random.uniform(kb, (1, fan_out), jnp.float32, -bound, bound)
        return w, b

    k1, k2, k3 = jax.random.split(key, 3)
    w1, b1 = linear(k1, d_in, H)
    w2, b2 = linear(k2, H, H)
    w3, b3 = linear(k3, H, 1)

    # Kernel-friendly packing (done here once, never per forward call):
    w1o = w1[:obs_dim].astype(jnp.bfloat16)      # (obs_dim, 256) bf16  -- fused torch.cat, part 1
    w1a = w1[obs_dim:].astype(jnp.bfloat16)      # (act_dim, 256) bf16  -- fused torch.cat, part 2
    w2b = w2.astype(jnp.bfloat16)                # (256, 256) bf16
    w3r = w3.T.astype(jnp.bfloat16)              # (1, 256) bf16 row vector (transposed layer 3)
    b3s = b3.reshape(1, 1)                       # (1, 1) f32
    return (w1o, w1a, b1, w2b, b2, w3r, b3s)


def reference_forward(obs, act, params):
    """Pure-JAX reference mirroring the kernel numerics (bf16 operands, f32 accumulation)."""
    w1o, w1a, b1, w2, b2, w3, b3 = params
    obs_b = obs.astype(jnp.bfloat16)
    act_b = act.astype(jnp.bfloat16)
    h1 = jnp.maximum(jnp.dot(obs_b, w1o, preferred_element_type=jnp.float32)
                     + jnp.dot(act_b, w1a, preferred_element_type=jnp.float32) + b1, 0.0)
    h2 = jnp.maximum(jnp.dot(h1.astype(jnp.bfloat16), w2,
                             preferred_element_type=jnp.float32) + b2, 0.0)
    q = jnp.dot(h2.astype(jnp.bfloat16), w3.T, preferred_element_type=jnp.float32) + b3
    return q


if __name__ == "__main__":
    key = jax.random.PRNGKey(0)
    k_obs, k_act, k_p1, k_p2, k_obs2, k_act2 = jax.random.split(key, 6)

    # MuJoCo-like shapes: obs_dim=17 (HalfCheetah), act_dim=6.
    OBS_DIM, ACT_DIM = 17, 6
    params = init_params(k_p1, OBS_DIM, ACT_DIM)

    # Small single-tile case (batch=8).
    B = 8
    obs = jax.random.normal(k_obs, (B, OBS_DIM), jnp.float32)
    act = jax.random.normal(k_act, (B, ACT_DIM), jnp.float32)
    q = jax.block_until_ready(soft_q_forward(obs, act, params))
    assert q.shape == (B, 1)
    assert jnp.allclose(q, reference_forward(obs, act, params), atol=2e-3, rtol=2e-3)

    # Multi-tile batch: exercises the batch grid + lane-packed (1, B) output.
    B2 = 512
    obs2 = jax.random.normal(k_obs2, (B2, OBS_DIM), jnp.float32)
    act2 = jax.random.normal(k_act2, (B2, ACT_DIM), jnp.float32)
    q2 = jax.block_until_ready(soft_q_forward(obs2, act2, params))
    assert q2.shape == (B2, 1)
    assert jnp.allclose(q2, reference_forward(obs2, act2, params), atol=2e-3, rtol=2e-3)

    # Fused twin critics (SAC Q1/Q2) in a single pallas_call.
    params2 = init_params(k_p2, OBS_DIM, ACT_DIM)
    q1t, q2t = soft_q_forward_twin(obs2, act2, params, params2)
    jax.block_until_ready((q1t, q2t))
    assert jnp.allclose(q1t, reference_forward(obs2, act2, params), atol=2e-3, rtol=2e-3)
    assert jnp.allclose(q2t, reference_forward(obs2, act2, params2), atol=2e-3, rtol=2e-3)

    print("KERNEL_OK")
</pallas_src>

<mosaic_0001>
module attributes {stable_mosaic.version = 11 : i64} {
  func.func @_soft_q_kernel(%arg0: i32, %arg1: memref<8x17xf32, #tpu.memory_space<vmem>>, %arg2: memref<8x6xf32, #tpu.memory_space<vmem>>, %arg3: memref<17x256xbf16, #tpu.memory_space<vmem>>, %arg4: memref<6x256xbf16, #tpu.memory_space<vmem>>, %arg5: memref<1x256xf32, #tpu.memory_space<vmem>>, %arg6: memref<256x256xbf16, #tpu.memory_space<vmem>>, %arg7: memref<1x256xf32, #tpu.memory_space<vmem>>, %arg8: memref<1x256xbf16, #tpu.memory_space<vmem>>, %arg9: memref<1x1xf32, #tpu.memory_space<vmem>>, %arg10: memref<1x8xf32, #tpu.memory_space<vmem>>) attributes {dimension_semantics = [#tpu.dimension_semantics<parallel>], iteration_bounds = array<i64: 1>, scalar_prefetch = 0 : i64, scratch_operands = 0 : i64, tpu.core_type = #tpu.core_type<tc>, window_params = [{transform_indices = @transform_0, window_bounds = array<i64: 8, 17>}, {transform_indices = @transform_1, window_bounds = array<i64: 8, 6>}, {pipeline_mode = #tpu.pipeline_mode<synchronous>, transform_indices = @transform_2, window_bounds = array<i64: 17, 256>}, {pipeline_mode = #tpu.pipeline_mode<synchronous>, transform_indices = @transform_3, window_bounds = array<i64: 6, 256>}, {pipeline_mode = #tpu.pipeline_mode<synchronous>, transform_indices = @transform_4, window_bounds = array<i64: 1, 256>}, {pipeline_mode = #tpu.pipeline_mode<synchronous>, transform_indices = @transform_5, window_bounds = array<i64: 256, 256>}, {pipeline_mode = #tpu.pipeline_mode<synchronous>, transform_indices = @transform_6, window_bounds = array<i64: 1, 256>}, {pipeline_mode = #tpu.pipeline_mode<synchronous>, transform_indices = @transform_7, window_bounds = array<i64: 1, 256>}, {pipeline_mode = #tpu.pipeline_mode<synchronous>, transform_indices = @transform_8, window_bounds = array<i64: 1, 1>}, {transform_indices = @transform_9, window_bounds = array<i64: 1, 8>}]} {
    %c0 = arith.constant 0 : index
    %c0_0 = arith.constant 0 : index
    %0 = vector.load %arg1[%c0, %c0_0] : memref<8x17xf32, #tpu.memory_space<vmem>>, vector<8x17xf32>
    %1 = arith.truncf %0 : vector<8x17xf32> to vector<8x17xbf16>
    %c0_1 = arith.constant 0 : index
    %c0_2 = arith.constant 0 : index
    %2 = vector.load %arg2[%c0_1, %c0_2] : memref<8x6xf32, #tpu.memory_space<vmem>>, vector<8x6xf32>
    %3 = arith.truncf %2 : vector<8x6xf32> to vector<8x6xbf16>
    %c0_3 = arith.constant 0 : index
    %c0_4 = arith.constant 0 : index
    %4 = vector.load %arg3[%c0_3, %c0_4] : memref<17x256xbf16, #tpu.memory_space<vmem>>, vector<17x256xbf16>
    %cst = arith.constant dense<0.000000e+00> : vector<8x256xf32>
    %5 = tpu.matmul %1, %4, %cst {dimension_numbers = #tpu.dot_dimension_numbers<[1], [0], [0], [1], [0, 0, 1, 1], [], []>} : vector<8x17xbf16>, vector<17x256xbf16>, vector<8x256xf32> -> vector<8x256xf32>
    %c0_5 = arith.constant 0 : index
    %c0_6 = arith.constant 0 : index
    %6 = vector.load %arg4[%c0_5, %c0_6] : memref<6x256xbf16, #tpu.memory_space<vmem>>, vector<6x256xbf16>
    %cst_7 = arith.constant dense<0.000000e+00> : vector<8x256xf32>
    %7 = tpu.matmul %3, %6, %cst_7 {dimension_numbers = #tpu.dot_dimension_numbers<[1], [0], [0], [1], [0, 0, 1, 1], [], []>} : vector<8x6xbf16>, vector<6x256xbf16>, vector<8x256xf32> -> vector<8x256xf32>
    %8 = arith.addf %5, %7 : vector<8x256xf32>
    %c0_8 = arith.constant 0 : index
    %c0_9 = arith.constant 0 : index
    %9 = vector.load %arg5[%c0_8, %c0_9] : memref<1x256xf32, #tpu.memory_space<vmem>>, vector<1x256xf32>
    %10 = vector.broadcast %9 : vector<1x256xf32> to vector<8x256xf32>
    %11 = arith.addf %8, %10 : vector<8x256xf32>
    %cst_10 = arith.constant 0.000000e+00 : f32
    %12 = vector.broadcast %cst_10 : f32 to vector<8x256xf32>
    %13 = arith.maximumf %11, %12 : vector<8x256xf32>
    %14 = arith.truncf %13 : vector<8x256xf32> to vector<8x256xbf16>
    %c0_11 = arith.constant 0 : index
    %c0_12 = arith.constant 0 : index
    %15 = vector.load %arg6[%c0_11, %c0_12] : memref<256x256xbf16, #tpu.memory_space<vmem>>, vector<256x256xbf16>
    %cst_13 = arith.constant dense<0.000000e+00> : vector<8x256xf32>
    %16 = tpu.matmul %14, %15, %cst_13 {dimension_numbers = #tpu.dot_dimension_numbers<[1], [0], [0], [1], [0, 0, 1, 1], [], []>} : vector<8x256xbf16>, vector<256x256xbf16>, vector<8x256xf32> -> vector<8x256xf32>
    %c0_14 = arith.constant 0 : index
    %c0_15 = arith.constant 0 : index
    %17 = vector.load %arg7[%c0_14, %c0_15] : memref<1x256xf32, #tpu.memory_space<vmem>>, vector<1x256xf32>
    %18 = vector.broadcast %17 : vector<1x256xf32> to vector<8x256xf32>
    %19 = arith.addf %16, %18 : vector<8x256xf32>
    %cst_16 = arith.constant 0.000000e+00 : f32
    %20 = vector.broadcast %cst_16 : f32 to vector<8x256xf32>
    %21 = arith.maximumf %19, %20 : vector<8x256xf32>
    %c0_17 = arith.constant 0 : index
    %c0_18 = arith.constant 0 : index
    %22 = vector.load %arg8[%c0_17, %c0_18] : memref<1x256xbf16, #tpu.memory_space<vmem>>, vector<1x256xbf16>
    %23 = arith.truncf %21 : vector<8x256xf32> to vector<8x256xbf16>
    %cst_19 = arith.constant dense<0.000000e+00> : vector<1x8xf32>
    %24 = tpu.matmul %22, %23, %cst_19 {dimension_numbers = #tpu.dot_dimension_numbers<[1], [1], [0], [0], [0, 0, 1, 0], [], []>} : vector<1x256xbf16>, vector<8x256xbf16>, vector<1x8xf32> -> vector<1x8xf32>
    %c0_20 = arith.constant 0 : index
    %c0_21 = arith.constant 0 : index
    %25 = vector.load %arg9[%c0_20, %c0_21] : memref<1x1xf32, #tpu.memory_space<vmem>>, vector<1x1xf32>
    %26 = vector.broadcast %25 : vector<1x1xf32> to vector<1x8xf32>
    %27 = arith.addf %24, %26 : vector<1x8xf32>
    %c0_22 = arith.constant 0 : index
    %c0_23 = arith.constant 0 : index
    %28 = vector.load %arg10[%c0_22, %c0_23] : memref<1x8xf32, #tpu.memory_space<vmem>>, vector<1x8xf32>
    tpu.vector_store %arg10[%c0_22, %c0_23], %27 {strides = array<i32>} : memref<1x8xf32, #tpu.memory_space<vmem>>, vector<1x8xf32>,
    return
  }
  func.func @transform_0(%arg0: i32) -> (i32, i32) {
    %c0_i32 = arith.constant 0 : i32
    %c0_i32_0 = arith.constant 0 : i32
    return %arg0, %c0_i32 : i32, i32
  }
  func.func @transform_1(%arg0: i32) -> (i32, i32) {
    %c0_i32 = arith.constant 0 : i32
    %c0_i32_0 = arith.constant 0 : i32
    return %arg0, %c0_i32 : i32, i32
  }
  func.func @transform_2(%arg0: i32) -> (i32, i32) {
    %c0_i32 = arith.constant 0 : i32
    %c0_i32_0 = arith.constant 0 : i32
    %c0_i32_1 = arith.constant 0 : i32
    return %c0_i32, %c0_i32_0 : i32, i32
  }
  func.func @transform_3(%arg0: i32) -> (i32, i32) {
    %c0_i32 = arith.constant 0 : i32
    %c0_i32_0 = arith.constant 0 : i32
    %c0_i32_1 = arith.constant 0 : i32
    return %c0_i32, %c0_i32_0 : i32, i32
  }
  func.func @transform_4(%arg0: i32) -> (i32, i32) {
    %c0_i32 = arith.constant 0 : i32
    %c0_i32_0 = arith.constant 0 : i32
    %c0_i32_1 = arith.constant 0 : i32
    return %c0_i32, %c0_i32_0 : i32, i32
  }
  func.func @transform_5(%arg0: i32) -> (i32, i32) {
    %c0_i32 = arith.constant 0 : i32
    %c0_i32_0 = arith.constant 0 : i32
    %c0_i32_1 = arith.constant 0 : i32
    return %c0_i32, %c0_i32_0 : i32, i32
  }
  func.func @transform_6(%arg0: i32) -> (i32, i32) {
    %c0_i32 = arith.constant 0 : i32
    %c0_i32_0 = arith.constant 0 : i32
    %c0_i32_1 = arith.constant 0 : i32
    return %c0_i32, %c0_i32_0 : i32, i32
  }
  func.func @transform_7(%arg0: i32) -> (i32, i32) {
    %c0_i32 = arith.constant 0 : i32
    %c0_i32_0 = arith.constant 0 : i32
    %c0_i32_1 = arith.constant 0 : i32
    return %c0_i32, %c0_i32_0 : i32, i32
  }
  func.func @transform_8(%arg0: i32) -> (i32, i32) {
    %c0_i32 = arith.constant 0 : i32
    %c0_i32_0 = arith.constant 0 : i32
    %c0_i32_1 = arith.constant 0 : i32
    return %c0_i32, %c0_i32_0 : i32, i32
  }
  func.func @transform_9(%arg0: i32) -> (i32, i32) {
    %c0_i32 = arith.constant 0 : i32
    %c0_i32_0 = arith.constant 0 : i32
    return %c0_i32, %arg0 : i32, i32
  }
}

</mosaic_0001>

<llo_original>
// kernel: tpu_custom_call.1
$region0: #{tpu_custom_call.1}
  #allocation0 [shape = 'u32[]', space=smem, size = 0x4, offset = 0x4, fixed_abs, tag = 'smem constant byte address 0x4 - core index']
  #allocation1 [shape = 'u32[144,128]{1,0:T(1,128)}', space=vmem, size = 0x12000, scoped, tag = 'internal scratch']
  #allocation2 [shape = 'f32[1,1]{1,0:T(1,128)S(1)}', space=vmem, size = 0x200, scoped, tag = 'scoped memory for tpu_custom_call.1']
  %s0 = inlined_call_operand.hbm [shape: f32[8,17], index: 0, kind: input, shape index: {}]
  %s1 = inlined_call_operand.hbm [shape: f32[8,6], index: 1, kind: input, shape index: {}]
  %s2 = inlined_call_operand.hbm [shape: bf16[17,256], index: 2, kind: input, shape index: {}]
  %s3 = inlined_call_operand.hbm [shape: bf16[6,256], index: 3, kind: input, shape index: {}]
  %s4 = inlined_call_operand.vmem [shape: f32[1,256], index: 4, kind: input, shape index: {}]
  %s5 = inlined_call_operand.hbm [shape: bf16[256,256], index: 5, kind: input, shape index: {}]
  %s6 = inlined_call_operand.vmem [shape: f32[1,256], index: 6, kind: input, shape index: {}]
  %s7 = inlined_call_operand.vmem [shape: bf16[1,256], index: 7, kind: input, shape index: {}]
  %s8 = inlined_call_operand.<no memory space> [shape: f32[1,1], index: 8, kind: input, shape index: {}]
  %s9 = inlined_call_operand.hbm [shape: f32[1,8], index: 9, kind: output, shape index: {}]
  %s10 = sld [smem:[#allocation0]]
  $region66: #{tpu_custom_call.1} parent=0
    _
  %s12 = ssub.s32 1, %s10
  %s13 = scalar_select 0, %s12, %s10
  %v14 = vstv %s8
  %15 = vst [vmem:[#allocation2] sm:$0x1] %v14
  $region1: #{tpu_custom_call.1} parent=0
    #allocation3 [shape = 'u8[4096]{0}', space=vmem, size = 0x1000, scoped, tag = 'input window, operand 0, single buffered']
    #allocation4 [shape = 's32[1]{0}', space=sflag, size = 0x4, scoped, tag = 'scoped memory for tpu_custom_call.1']
    #allocation5 [shape = 's32[1]{0}', space=sflag, size = 0x4, scoped, tag = 'scoped memory for tpu_custom_call.1']
    #allocation6 [shape = 'u8[4096]{0}', space=vmem, size = 0x1000, scoped, tag = 'input window, operand 1, single buffered']
    #allocation7 [shape = 's32[1]{0}', space=sflag, size = 0x4, scoped, tag = 'scoped memory for tpu_custom_call.1']
    #allocation8 [shape = 'u8[12288]{0}', space=vmem, size = 0x3000, scoped, tag = 'input window, operand 2, single buffered']
    #allocation9 [shape = 'u8[4096]{0}', space=vmem, size = 0x1000, scoped, tag = 'input window, operand 3, single buffered']
    #allocation10 [shape = 's32[1]{0}', space=sflag, size = 0x4, scoped, tag = 'scoped memory for tpu_custom_call.1']
    #allocation11 [shape = 'u8[131072]{0}', space=vmem, size = 0x20000, scoped, tag = 'input window, operand 5, single buffered']
    #allocation12 [shape = 'u8[512]{0}', space=vmem, size = 0x400, scoped, tag = 'output window, operand 0, single buffered']
    %16 = vsyncpa [#allocation4], 0
    %17 = vsyncpa [#allocation7], 0
    %18 = vsyncpa [#allocation10], 0
    %19 = vsyncpa [#allocation5], 0
    // Predicated region
    $region2: #{tpu_custom_call.1} parent=1 // pred_check
      _
    $region3: #{tpu_custom_call.1} parent=1 // pred_check_branch
      %21 = sbr.rel (0) target = $region5
    $region4: #{tpu_custom_call.1} parent=1 // pred_region
      %s23 = ssub.s32 128, 128
      %24 = vsyncadd [#allocation4], %s23
      %s26 = sshll.u32 [#allocation3], 4
      %s27 = int_to_ptr.vmem [resolvable:$true] %s26
      %29 = dma.hbm_to_vmem [thread:$0]  %s0, 128, %s27, [#allocation4]
    $region5: #{tpu_custom_call.1} parent=1 // pred_fallthru
      _
    // Predicated region
    $region6: #{tpu_custom_call.1} parent=1 // pred_check
      _
    $region7: #{tpu_custom_call.1} parent=1 // pred_check_branch
      %31 = sbr.rel (0) target = $region9
    $region8: #{tpu_custom_call.1} parent=1 // pred_region
      %s33 = ssub.s32 128, 128
      %34 = vsyncadd [#allocation7], %s33
      %s36 = sshll.u32 [#allocation6], 4
      %s37 = int_to_ptr.vmem [resolvable:$true] %s36
      %39 = dma.hbm_to_vmem [thread:$0]  %s1, 128, %s37, [#allocation7]
    $region9: #{tpu_custom_call.1} parent=1 // pred_fallthru
      _
    // Predicated region
    $region10: #{tpu_custom_call.1} parent=1 // pred_check
      _
    $region11: #{tpu_custom_call.1} parent=1 // pred_check_branch
      %41 = sbr.rel (0) target = $region13
    $region12: #{tpu_custom_call.1} parent=1 // pred_region
      %s43 = ssub.s32 384, 384
      %44 = vsyncadd [#allocation7], %s43
      %s45 = sshll.u32 [#allocation8], 4
      %s46 = int_to_ptr.vmem [resolvable:$true] %s45
      %51 = dma.hbm_to_vmem [thread:$0]  %s2, 384, %s46, [#allocation7], 128, 128, 8
    $region13: #{tpu_custom_call.1} parent=1 // pred_fallthru
      _
    // Predicated region
    $region14: #{tpu_custom_call.1} parent=1 // pred_check
      _
    $region15: #{tpu_custom_call.1} parent=1 // pred_check_branch
      %53 = sbr.rel (0) target = $region17
    $region16: #{tpu_custom_call.1} parent=1 // pred_region
      %s55 = ssub.s32 128, 128
      %56 = vsyncadd [#allocation10], %s55
      %s58 = sshll.u32 [#allocation9], 4
      %s59 = int_to_ptr.vmem [resolvable:$true] %s58
      %61 = dma.hbm_to_vmem [thread:$0]  %s3, 128, %s59, [#allocation10]
    $region17: #{tpu_custom_call.1} parent=1 // pred_fallthru
      _
    // Predicated region
    $region18: #{tpu_custom_call.1} parent=1 // pred_check
      _
    $region19: #{tpu_custom_call.1} parent=1 // pred_check_branch
      %63 = sbr.rel (0) target = $region21
    $region20: #{tpu_custom_call.1} parent=1 // pred_region
      _
    $region21: #{tpu_custom_call.1} parent=1 // pred_fallthru
      _
    // Predicated region
    $region22: #{tpu_custom_call.1} parent=1 // pred_check
      _
    $region23: #{tpu_custom_call.1} parent=1 // pred_check_branch
      %65 = sbr.rel (0) target = $region25
    $region24: #{tpu_custom_call.1} parent=1 // pred_region
      %s67 = ssub.s32 4096, 4096
      %68 = vsyncadd [#allocation10], %s67
      %s69 = sshll.u32 [#allocation11], 4
      %s70 = int_to_ptr.vmem [resolvable:$true] %s69
      %75 = dma.hbm_to_vmem [thread:$0]  %s5, 4096, %s70, [#allocation10], 128, 128, 8
    $region25: #{tpu_custom_call.1} parent=1 // pred_fallthru
      _
    // Predicated region
    $region26: #{tpu_custom_call.1} parent=1 // pred_check
      _
    $region27: #{tpu_custom_call.1} parent=1 // pred_check_branch
      %77 = sbr.rel (0) target = $region29
    $region28: #{tpu_custom_call.1} parent=1 // pred_region
      _
    $region29: #{tpu_custom_call.1} parent=1 // pred_fallthru
      _
    // Predicated region
    $region30: #{tpu_custom_call.1} parent=1 // pred_check
      _
    $region31: #{tpu_custom_call.1} parent=1 // pred_check_branch
      %79 = sbr.rel (0) target = $region33
    $region32: #{tpu_custom_call.1} parent=1 // pred_region
      _
    $region33: #{tpu_custom_call.1} parent=1 // pred_fallthru
      _
    // Predicated region
    $region34: #{tpu_custom_call.1} parent=1 // pred_check
      _
    $region35: #{tpu_custom_call.1} parent=1 // pred_check_branch
      %81 = sbr.rel (0) target = $region37
    $region36: #{tpu_custom_call.1} parent=1 // pred_region
      _
    $region37: #{tpu_custom_call.1} parent=1 // pred_fallthru
      _
    // Predicated region
    $region38: #{tpu_custom_call.1} parent=1 // pred_check
      _
    $region39: #{tpu_custom_call.1} parent=1 // pred_check_branch
      %83 = sbr.rel (0) target = $region41
    $region40: #{tpu_custom_call.1} parent=1 // pred_region
      %84 = dma.done [#allocation4], 128
    $region41: #{tpu_custom_call.1} parent=1 // pred_fallthru
      _
    // Predicated region
    $region42: #{tpu_custom_call.1} parent=1 // pred_check
      _
    $region43: #{tpu_custom_call.1} parent=1 // pred_check_branch
      %86 = sbr.rel (0) target = $region45
    $region44: #{tpu_custom_call.1} parent=1 // pred_region
      %87 = dma.done [#allocation7], 128
    $region45: #{tpu_custom_call.1} parent=1 // pred_fallthru
      _
    // Predicated region
    $region46: #{tpu_custom_call.1} parent=1 // pred_check
      _
    $region47: #{tpu_custom_call.1} parent=1 // pred_check_branch
      %89 = sbr.rel (0) target = $region49
    $region48: #{tpu_custom_call.1} parent=1 // pred_region
      %90 = dma.done [#allocation7], 384
    $region49: #{tpu_custom_call.1} parent=1 // pred_fallthru
      _
    // Predicated region
    $region50: #{tpu_custom_call.1} parent=1 // pred_check
      _
    $region51: #{tpu_custom_call.1} parent=1 // pred_check_branch
      %92 = sbr.rel (0) target = $region53
    $region52: #{tpu_custom_call.1} parent=1 // pred_region
      %93 = dma.done [#allocation10], 128
    $region53: #{tpu_custom_call.1} parent=1 // pred_fallthru
      _
    // Predicated region
    $region54: #{tpu_custom_call.1} parent=1 // pred_check
      _
    $region55: #{tpu_custom_call.1} parent=1 // pred_check_branch
      %95 = sbr.rel (0) target = $region57
    $region56: #{tpu_custom_call.1} parent=1 // pred_region
      %96 = dma.done [#allocation10], 4096
    $region57: #{tpu_custom_call.1} parent=1 // pred_fallthru
      _
    %v98 = vld [vmem:[#allocation3] sm:$0xff]
    %v99 = vpack.c.bf16 %v98, %v98
    %v100 = vld [vmem:[#allocation6] sm:$0xff]
    %v101 = vpack.c.bf16 %v100, %v100
    %v102 = vld [vmem:[#allocation8] sm:$0xff]
    %v103 = vld [vmem:[#allocation8 + $0x8] sm:$0xff]
    %v104 = vld [vmem:[#allocation8 + $0x10] sm:$0x11]
    %v105 = vld [vmem:[#allocation9] sm:$0x77]
    %v107 = vunpack.c.l.b16 %v105
    %v108 = vunpack.c.h.b16 %v105
    %v109 = vpack.c.b16 %v107, %v107
    %v110 = vpack.c.b16 %v108, %v108
    %vm111 = vcmask 48128
    %v113 = vsel %vm111, %v101, 0
    %vm115 = vcmask 1042432
    %v117 = vsel %vm115, %v109, 0
    %v120 = vsel %vm115, %v110, 0
    %122 = vmatprep.subr.bf16.mxu0 0
    %123 = vmatpush1.bf16.msra.mxu0 0
    %124 = vmatprep.subr.bf16.mxu0 0
    %125 = vmatpush1.bf16.msra.mxu0 0
    %126 = vmatprep.subr.bf16.mxu0 0
    %127 = vmatpush1.bf16.msra.mxu0 0
    %128 = vmatprep.subr.bf16.mxu0 0
    %129 = vmatpush1.bf16.msra.mxu0 0
    %130 = vmatprep.subr.bf16.mxu0 0
    %131 = vmatpush1.bf16.msra.mxu0 0
    %132 = vmatprep.subr.bf16.mxu0 0
    %133 = vmatpush1.bf16.msra.mxu0 0
    %134 = vmatprep.subr.bf16.mxu0 0
    %135 = vmatpush1.bf16.msra.mxu0 0
    %136 = vmatprep.subr.bf16.mxu0 %v120
    %137 = vmatpush1.bf16.msra.mxu0 %v117
    %138 = vmatprep.subr.bf16.mxu0 0
    %139 = vmatpush2.bf16.msra.mxu0 0
    %140 = vmatprep.subr.bf16.mxu0 0
    %141 = vmatpush2.bf16.msra.mxu0 0
    %142 = vmatprep.subr.bf16.mxu0 0
    %143 = vmatpush2.bf16.msra.mxu0 0
    %144 = vmatprep.subr.bf16.mxu0 0
    %145 = vmatpush2.bf16.msra.mxu0 0
    %146 = vmatprep.subr.bf16.mxu0 0
    %147 = vmatpush2.bf16.msra.mxu0 0
    %148 = vmatprep.subr.bf16.mxu0 0
    %149 = vmatpush2.bf16.msra.mxu0 0
    %150 = vmatprep.subr.bf16.mxu0 0
    %151 = vmatpush2.bf16.msra.mxu0 0
    %152 = vmatprep.subr.bf16.mxu0 0
    %153 = vmatpush2.bf16.msra.mxu0 0
    %154 = vmatprep.mubr.bf16.mxu0 0
    %155 = vmatmul.mubr.bf16.gmra.mxu0 %v113
    %v156 = vpop.f32.mrf.mxu0
    %v157 = vadd.f32 0.0, %v156
    %v158 = vpop.f32.mrf.mxu0
    %v159 = vadd.f32 0.0, %v158
    %v160 = vpop.f32.mrf.mxu0
    %v161 = vpop.f32.mrf.mxu0
    %162 = vdwg.mxu0
    %v166 = vunpack.c.l.b16 %v102
    %v167 = vunpack.c.h.b16 %v102
    %v168 = vunpack.c.l.b16 %v103
    %v169 = vunpack.c.h.b16 %v103
    %v170 = vunpack.c.l.b16 %v104
    %v171 = vunpack.c.h.b16 %v104
    %v172 = vpack.c.b16 %v168, %v166
    %v173 = vpack.c.b16 %v169, %v167
    %v174 = vpack.c.b16 %v170, %v170
    %v175 = vpack.c.b16 %v171, %v171
    %vm178 = vcmask 138240
    %v180 = vsel %vm178, %v99, 0
    %vm182 = vcmask 1040384
    %v183 = vsel 0, 4294967295, 65535
    %v184 = vsel %vm182, %v183, 0
    %v186 = vand.u32 %v174, %v184
    %v189 = vand.u32 %v175, %v184
    %191 = vmatprep.subr.bf16.mxu0 0
    %192 = vmatpush1.bf16.msra.mxu0 0
    %193 = vmatprep.subr.bf16.mxu0 0
    %194 = vmatpush1.bf16.msra.mxu0 0
    %195 = vmatprep.subr.bf16.mxu0 0
    %196 = vmatpush1.bf16.msra.mxu0 0
    %197 = vmatprep.subr.bf16.mxu0 0
    %198 = vmatpush1.bf16.msra.mxu0 0
    %199 = vmatprep.subr.bf16.mxu0 0
    %200 = vmatpush1.bf16.msra.mxu0 0
    %201 = vmatprep.subr.bf16.mxu0 0
    %202 = vmatpush1.bf16.msra.mxu0 0
    %203 = vmatprep.subr.bf16.mxu0 %v189
    %204 = vmatpush1.bf16.msra.mxu0 %v186
    %205 = vmatprep.subr.bf16.mxu0 %v173
    %206 = vmatpush1.bf16.msra.mxu0 %v172
    %207 = vmatprep.subr.bf16.mxu0 0
    %208 = vmatpush2.bf16.msra.mxu0 0
    %209 = vmatprep.subr.bf16.mxu0 0
    %210 = vmatpush2.bf16.msra.mxu0 0
    %211 = vmatprep.subr.bf16.mxu0 0
    %212 = vmatpush2.bf16.msra.mxu0 0
    %213 = vmatprep.subr.bf16.mxu0 0
    %214 = vmatpush2.bf16.msra.mxu0 0
    %215 = vmatprep.subr.bf16.mxu0 0
    %216 = vmatpush2.bf16.msra.mxu0 0
    %217 = vmatprep.subr.bf16.mxu0 0
    %218 = vmatpush2.bf16.msra.mxu0 0
    %219 = vmatprep.subr.bf16.mxu0 0
    %220 = vmatpush2.bf16.msra.mxu0 0
    %221 = vmatprep.subr.bf16.mxu0 0
    %222 = vmatpush2.bf16.msra.mxu0 0
    %223 = vmatprep.mubr.bf16.mxu0 0
    %224 = vmatmul.mubr.bf16.gmra.mxu0 %v180
    %v225 = vpop.f32.mrf.mxu0
    %v226 = vadd.f32 %v157, %v225
    %v227 = vpop.f32.mrf.mxu0
    %v228 = vadd.f32 %v159, %v227
    %v229 = vpop.f32.mrf.mxu0
    %v230 = vpop.f32.mrf.mxu0
    %231 = vdwg.mxu0
    %v232 = vld [vmem:[%s4] sm:$0x3]
    %v234 = vlaneseq
    %v235 = vshrl.u32 %v234, 7
    %v236 = vsub.s32 0, %v235
    %v237 = vrot.slane %v232, %v236
    %v238 = vlaneseq
    %v239 = vshrl.u32 %v238, 7
    %v240 = vsub.s32 1, %v239
    %v241 = vrot.slane %v232, %v240
    %v244 = vadd.f32 %v226, %v237
    %v245 = vadd.f32 %v228, %v241
    %v246 = vmax.f32 %v244, 0.0
    %v247 = vmax.f32 %v245, 0.0
    %v248 = vpack.c.bf16 %v246, %v246
    %v249 = vpack.c.bf16 %v247, %v247
    %v250 = vld [vmem:[#allocation11] sm:$0xff]
    %v251 = vld [vmem:[#allocation11 + $0x8] sm:$0xff]
    %v252 = vld [vmem:[#allocation11 + $0x10] sm:$0xff]
    %v253 = vld [vmem:[#allocation11 + $0x18] sm:$0xff]
    %v254 = vld [vmem:[#allocation11 + $0x20] sm:$0xff]
    %v255 = vld [vmem:[#allocation11 + $0x28] sm:$0xff]
    %v256 = vld [vmem:[#allocation11 + $0x30] sm:$0xff]
    %v257 = vld [vmem:[#allocation11 + $0x38] sm:$0xff]
    %v258 = vld [vmem:[#allocation11 + $0x40] sm:$0xff]
    %v259 = vld [vmem:[#allocation11 + $0x48] sm:$0xff]
    %v260 = vld [vmem:[#allocation11 + $0x50] sm:$0xff]
    %v261 = vld [vmem:[#allocation11 + $0x58] sm:$0xff]
    %v262 = vld [vmem:[#allocation11 + $0x60] sm:$0xff]
    %v263 = vld [vmem:[#allocation11 + $0x68] sm:$0xff]
    %v264 = vld [vmem:[#allocation11 + $0x70] sm:$0xff]
    %v265 = vld [vmem:[#allocation11 + $0x78] sm:$0xff]
    %v266 = vld [vmem:[#allocation11 + $0x80] sm:$0xff]
    %v267 = vld [vmem:[#allocation11 + $0x88] sm:$0xff]
    %v268 = vld [vmem:[#allocation11 + $0x90] sm:$0xff]
    %v269 = vld [vmem:[#allocation11 + $0x98] sm:$0xff]
    %v270 = vld [vmem:[#allocation11 + $0xa0] sm:$0xff]
    %v271 = vld [vmem:[#allocation11 + $0xa8] sm:$0xff]
    %v272 = vld [vmem:[#allocation11 + $0xb0] sm:$0xff]
    %v273 = vld [vmem:[#allocation11 + $0xb8] sm:$0xff]
    %v274 = vld [vmem:[#allocation11 + $0xc0] sm:$0xff]
    %v275 = vld [vmem:[#allocation11 + $0xc8] sm:$0xff]
    %v276 = vld [vmem:[#allocation11 + $0xd0] sm:$0xff]
    %v277 = vld [vmem:[#allocation11 + $0xd8] sm:$0xff]
    %v278 = vld [vmem:[#allocation11 + $0xe0] sm:$0xff]
    %v279 = vld [vmem:[#allocation11 + $0xe8] sm:$0xff]
    %v280 = vld [vmem:[#allocation11 + $0xf0] sm:$0xff]
    %v281 = vld [vmem:[#allocation11 + $0xf8] sm:$0xff]
    %v282 = vld [vmem:[%s6] sm:$0x3]
    %v284 = vlaneseq
    %v285 = vshrl.u32 %v284, 7
    %v286 = vsub.s32 0, %v285
    %v287 = vrot.slane %v282, %v286
    %v288 = vlaneseq
    %v289 = vshrl.u32 %v288, 7
    %v290 = vsub.s32 1, %v289
    %v291 = vrot.slane %v282, %v290
    %v326 = vunpack.c.l.b16 %v250
    %v327 = vunpack.c.h.b16 %v250
    %v328 = vunpack.c.l.b16 %v251
    %v329 = vunpack.c.h.b16 %v251
    %v330 = vunpack.c.l.b16 %v252
    %v331 = vunpack.c.h.b16 %v252
    %v332 = vunpack.c.l.b16 %v253
    %v333 = vunpack.c.h.b16 %v253
    %v334 = vunpack.c.l.b16 %v254
    %v335 = vunpack.c.h.b16 %v254
    %v336 = vunpack.c.l.b16 %v255
    %v337 = vunpack.c.h.b16 %v255
    %v338 = vunpack.c.l.b16 %v256
    %v339 = vunpack.c.h.b16 %v256
    %v340 = vunpack.c.l.b16 %v257
    %v341 = vunpack.c.h.b16 %v257
    %v342 = vunpack.c.l.b16 %v258
    %v343 = vunpack.c.h.b16 %v258
    %v344 = vunpack.c.l.b16 %v259
    %v345 = vunpack.c.h.b16 %v259
    %v346 = vunpack.c.l.b16 %v260
    %v347 = vunpack.c.h.b16 %v260
    %v348 = vunpack.c.l.b16 %v261
    %v349 = vunpack.c.h.b16 %v261
    %v350 = vunpack.c.l.b16 %v262
    %v351 = vunpack.c.h.b16 %v262
    %v352 = vunpack.c.l.b16 %v263
    %v353 = vunpack.c.h.b16 %v263
    %v354 = vunpack.c.l.b16 %v264
    %v355 = vunpack.c.h.b16 %v264
    %v356 = vunpack.c.l.b16 %v265
    %v357 = vunpack.c.h.b16 %v265
    %v358 = vunpack.c.l.b16 %v266
    %v359 = vunpack.c.h.b16 %v266
    %v360 = vunpack.c.l.b16 %v267
    %v361 = vunpack.c.h.b16 %v267
    %v362 = vunpack.c.l.b16 %v268
    %v363 = vunpack.c.h.b16 %v268
    %v364 = vunpack.c.l.b16 %v269
    %v365 = vunpack.c.h.b16 %v269
    %v366 = vunpack.c.l.b16 %v270
    %v367 = vunpack.c.h.b16 %v270
    %v368 = vunpack.c.l.b16 %v271
    %v369 = vunpack.c.h.b16 %v271
    %v370 = vunpack.c.l.b16 %v272
    %v371 = vunpack.c.h.b16 %v272
    %v372 = vunpack.c.l.b16 %v273
    %v373 = vunpack.c.h.b16 %v273
    %v374 = vunpack.c.l.b16 %v274
    %v375 = vunpack.c.h.b16 %v274
    %v376 = vunpack.c.l.b16 %v275
    %v377 = vunpack.c.h.b16 %v275
    %v378 = vunpack.c.l.b16 %v276
    %v379 = vunpack.c.h.b16 %v276
    %v380 = vunpack.c.l.b16 %v277
    %v381 = vunpack.c.h.b16 %v277
    %v382 = vunpack.c.l.b16 %v278
    %v383 = vunpack.c.h.b16 %v278
    %v384 = vunpack.c.l.b16 %v279
    %v385 = vunpack.c.h.b16 %v279
    %v386 = vunpack.c.l.b16 %v280
    %v387 = vunpack.c.h.b16 %v280
    %v388 = vunpack.c.l.b16 %v281
    %v389 = vunpack.c.h.b16 %v281
    %v390 = vpack.c.b16 %v328, %v326
    %v391 = vpack.c.b16 %v329, %v327
    %v392 = vpack.c.b16 %v332, %v330
    %v393 = vpack.c.b16 %v333, %v331
    %v394 = vpack.c.b16 %v336, %v334
    %v395 = vpack.c.b16 %v337, %v335
    %v396 = vpack.c.b16 %v340, %v338
    %v397 = vpack.c.b16 %v341, %v339
    %v398 = vpack.c.b16 %v344, %v342
    %v399 = vpack.c.b16 %v345, %v343
    %v400 = vpack.c.b16 %v348, %v346
    %v401 = vpack.c.b16 %v349, %v347
    %v402 = vpack.c.b16 %v352, %v350
    %v403 = vpack.c.b16 %v353, %v351
    %v404 = vpack.c.b16 %v356, %v354
    %v405 = vpack.c.b16 %v357, %v355
    %v406 = vpack.c.b16 %v360, %v358
    %v407 = vpack.c.b16 %v361, %v359
    %v408 = vpack.c.b16 %v364, %v362
    %v409 = vpack.c.b16 %v365, %v363
    %v410 = vpack.c.b16 %v368, %v366
    %v411 = vpack.c.b16 %v369, %v367
    %v412 = vpack.c.b16 %v372, %v370
    %v413 = vpack.c.b16 %v373, %v371
    %v414 = vpack.c.b16 %v376, %v374
    %v415 = vpack.c.b16 %v377, %v375
    %v416 = vpack.c.b16 %v380, %v378
    %v417 = vpack.c.b16 %v381, %v379
    %v418 = vpack.c.b16 %v384, %v382
    %v419 = vpack.c.b16 %v385, %v383
    %v420 = vpack.c.b16 %v388, %v386
    %v421 = vpack.c.b16 %v389, %v387
    %454 = vmatprep.subr.bf16.mxu0 %v405
    %455 = vmatpush1.bf16.msra.mxu0 %v404
    %456 = vmatprep.subr.bf16.mxu0 %v403
    %457 = vmatpush1.bf16.msra.mxu0 %v402
    %458 = vmatprep.subr.bf16.mxu0 %v401
    %459 = vmatpush1.bf16.msra.mxu0 %v400
    %460 = vmatprep.subr.bf16.mxu0 %v399
    %461 = vmatpush1.bf16.msra.mxu0 %v398
    %462 = vmatprep.subr.bf16.mxu0 %v397
    %463 = vmatpush1.bf16.msra.mxu0 %v396
    %464 = vmatprep.subr.bf16.mxu0 %v395
    %465 = vmatpush1.bf16.msra.mxu0 %v394
    %466 = vmatprep.subr.bf16.mxu0 %v393
    %467 = vmatpush1.bf16.msra.mxu0 %v392
    %468 = vmatprep.subr.bf16.mxu0 %v391
    %469 = vmatpush1.bf16.msra.mxu0 %v390
    %470 = vmatprep.subr.bf16.mxu0 %v421
    %471 = vmatpush2.bf16.msra.mxu0 %v420
    %472 = vmatprep.subr.bf16.mxu0 %v419
    %473 = vmatpush2.bf16.msra.mxu0 %v418
    %474 = vmatprep.subr.bf16.mxu0 %v417
    %475 = vmatpush2.bf16.msra.mxu0 %v416
    %476 = vmatprep.subr.bf16.mxu0 %v415
    %477 = vmatpush2.bf16.msra.mxu0 %v414
    %478 = vmatprep.subr.bf16.mxu0 %v413
    %479 = vmatpush2.bf16.msra.mxu0 %v412
    %480 = vmatprep.subr.bf16.mxu0 %v411
    %481 = vmatpush2.bf16.msra.mxu0 %v410
    %482 = vmatprep.subr.bf16.mxu0 %v409
    %483 = vmatpush2.bf16.msra.mxu0 %v408
    %484 = vmatprep.subr.bf16.mxu0 %v407
    %485 = vmatpush2.bf16.msra.mxu0 %v406
    %486 = vmatprep.mubr.bf16.mxu0 %v249
    %487 = vmatmul.mubr.bf16.gmra.mxu0 %v248
    %v488 = vpop.f32.mrf.mxu0
    %v489 = vadd.f32 %v287, %v488
    %v490 = vpop.f32.mrf.mxu0
    %v491 = vadd.f32 %v291, %v490
    %v492 = vpop.f32.mrf.mxu0
    %v493 = vpop.f32.mrf.mxu0
    %494 = vdwg.mxu0
    %v495 = vmax.f32 %v489, 0.0
    %v496 = vmax.f32 %v491, 0.0
    %v497 = vld [vmem:[%s7] sm:$0x3]
    %v498 = vpack.c.bf16 %v495, %v495
    %v499 = vpack.c.bf16 %v496, %v496
    %v500 = vld [vmem:[#allocation2] sm:$0x1]
    %502 = vset.pattern.permute.xlu0 0
    %503 = vperm.xlu0 %502, %v500
    %v504 = vpop.permute.xlu0 %503
    %v506 = vlaneseq
    %v507 = vshrl.u32 %v506, 7
    %v508 = vsub.s32 0, %v507
    %v509 = vrot.slane %v504, %v508
    %v512 = vunpack.c.l.s4 1966171168
    %v513 = vunpack.c.0.s8 %v512
    %v514 = vlaneseq
    %v515 = vshrl.u32 %v514, 7
    %v516 = vsub.s32 %v513, %v515
    %v517 = vrot.slane %v497, %v516
    %v518 = vcombine.high %v517, %v517
    %v520 = vunpack.c.l.s4 1966171168
    %v521 = vunpack.c.0.s8 %v520
    %v522 = vlaneseq
    %v523 = vshrl.u32 %v522, 7
    %v524 = vsub.s32 %v521, %v523
    %v525 = vrot.slane %v517, %v524
    %v527 = vunpack.c.l.s4 1966171168
    %v528 = vunpack.c.0.s8 %v527
    %v529 = vlaneseq
    %v530 = vshrl.u32 %v529, 7
    %v531 = vsub.s32 %v528, %v530
    %v532 = vrot.slane %v518, %v531
    %535 = vmatprep.subr.bf16.mxu0 0
    %536 = vmatpush1.bf16.xpose.msra.mxu0 0
    %537 = vmatprep.subr.bf16.mxu0 0
    %538 = vmatpush1.bf16.xpose.msra.mxu0 0
    %539 = vmatprep.subr.bf16.mxu0 0
    %540 = vmatpush1.bf16.xpose.msra.mxu0 0
    %541 = vmatprep.subr.bf16.mxu0 0
    %542 = vmatpush1.bf16.xpose.msra.mxu0 0
    %543 = vmatprep.subr.bf16.mxu0 0
    %544 = vmatpush1.bf16.xpose.msra.mxu0 0
    %545 = vmatprep.subr.bf16.mxu0 0
    %546 = vmatpush1.bf16.xpose.msra.mxu0 0
    %547 = vmatprep.subr.bf16.mxu0 0
    %548 = vmatpush1.bf16.xpose.msra.mxu0 0
    %549 = vmatprep.subr.bf16.mxu0 %v499
    %550 = vmatpush1.bf16.xpose.msra.mxu0 %v498
    %551 = vmatprep.subr.bf16.mxu0 0
    %552 = vmatpush2.bf16.xpose.msra.mxu0 0
    %553 = vmatprep.subr.bf16.mxu0 0
    %554 = vmatpush2.bf16.xpose.msra.mxu0 0
    %555 = vmatprep.subr.bf16.mxu0 0
    %556 = vmatpush2.bf16.xpose.msra.mxu0 0
    %557 = vmatprep.subr.bf16.mxu0 0
    %558 = vmatpush2.bf16.xpose.msra.mxu0 0
    %559 = vmatprep.subr.bf16.mxu0 0
    %560 = vmatpush2.bf16.xpose.msra.mxu0 0
    %561 = vmatprep.subr.bf16.mxu0 0
    %562 = vmatpush2.bf16.xpose.msra.mxu0 0
    %563 = vmatprep.subr.bf16.mxu0 0
    %564 = vmatpush2.bf16.xpose.msra.mxu0 0
    %565 = vmatprep.subr.bf16.mxu0 0
    %566 = vmatpush2.bf16.xpose.msra.mxu0 0
    %567 = vmatprep.mubr.bf16.mxu0 %v532
    %568 = vmatmul.mubr.bf16.gmra.mxu0 %v525
    %v569 = vpop.f32.mrf.mxu0
    %v570 = vadd.f32 %v509, %v569
    %v571 = vpop.f32.mrf.mxu0
    %v572 = vpop.f32.mrf.mxu0
    %v573 = vpop.f32.mrf.mxu0
    %574 = vdwg.mxu0
    %vm575 = vcmask 57344
    %576 = vst.msk [vmem:[#allocation12] sm:$0x1] %vm575, %v570
    // Predicated region
    $region58: #{tpu_custom_call.1} parent=1 // pred_check
      _
    $region59: #{tpu_custom_call.1} parent=1 // pred_check_branch
      %578 = sbr.rel (0) target = $region61
    $region60: #{tpu_custom_call.1} parent=1 // pred_region
      %s580 = ssub.s32 16, 16
      %581 = vsyncadd [#allocation5], %s580
      %s583 = sshll.u32 [#allocation12], 4
      %s584 = int_to_ptr.vmem [resolvable:$true] %s583
      %586 = dma.vmem_to_hbm [thread:$0]  %s584, 16, %s9, [#allocation5]
    $region61: #{tpu_custom_call.1} parent=1 // pred_fallthru
      _
    // Predicated region
    $region62: #{tpu_custom_call.1} parent=1 // pred_check
      _
    $region63: #{tpu_custom_call.1} parent=1 // pred_check_branch
      %588 = sbr.rel (0) target = $region65
    $region64: #{tpu_custom_call.1} parent=1 // pred_region
      %589 = dma.done [#allocation5], 16
    $region65: #{tpu_custom_call.1} parent=1 // pred_fallthru
      _
    %590 = vsyncpa [#allocation4], 1
    %591 = vsyncpa [#allocation7], 1
    %592 = vsyncpa [#allocation10], 1
    %593 = vsyncpa [#allocation5], 1

</llo_original>
